<compile_context>
chip_gen: v6e
topology: v6e:2x2x1
jax: 0.10.0
libtpu: 0.0.40
codegen_flags: <defaults>
</compile_context>

<pallas_src>
import jax
import jax.numpy as jnp
from jax.experimental import pallas as pl
from jax.experimental.pallas import tpu as pltpu


def committor_kernel(xT_ref, w1_ref, b1_ref, w2_ref, b2_ref, o_ref):
    # xT_ref: (dim, TILE_N)   w1_ref: (hidden, dim)   b1_ref/w2_ref: (hidden, 1)
    # b2_ref: (1, 1)          o_ref: (1, TILE_N)
    xT = xT_ref[...]
    w1 = w1_ref[...]
    dim = xT.shape[0]

    # Layer 1: hT = tanh(W1 @ xT + b1) as `dim` rank-1 VPU FMAs (no MXU needed
    # for K=2).  w1[:, k:k+1] lane-broadcasts, xT[k:k+1, :] sublane-broadcasts.
    acc = w1[:, 0:1] * xT[0:1, :]                      # (hidden, TILE_N)
    for k in range(1, dim):                            # dim is tiny & static
        acc = acc + w1[:, k:k+1] * xT[k:k+1, :]
    hT = jnp.tanh(acc + b1_ref[...])                   # EUP tanh, (hidden, TILE_N)

    # Layer 2: yT = w2^T @ hT + b2 as VPU multiply + XLU sublane reduce.
    # (MXU is idle and could take this, but EUP tanh is the binding unit.)
    yT = jnp.sum(hT * w2_ref[...], axis=0, keepdims=True) + b2_ref[...]
    o_ref[...] = yT.astype(o_ref.dtype)                # (1, TILE_N) lane-dense store


def _reference_forward(x, w1, b1, w2, b2):
    # PyTorch layout: y = tanh(x @ W1^T + b1) @ W2^T + b2, squeezed.
    return jnp.squeeze(jnp.tanh(x @ w1.T + b1) @ w2.T + b2, axis=-1)


def _choose_tile(n, max_tile):
    """Even step count >= 2 (v7x 2-TC sharding), tile sized from N (small tail
    padding), capped at max_tile (multiple of 128) for the VMEM budget."""
    assert max_tile % 128 == 0
    steps = max(2, -(-n // max_tile))       # cdiv(n, max_tile), at least 2
    if steps % 2:
        steps += 1                          # even splits cleanly across 2 TCs
    per_step = -(-n // steps)               # cdiv(n, steps)
    tile = ((per_step + 127) // 128) * 128  # round up to lane multiple
    return max(128, min(tile, max_tile))


def committor_net(x, w1, b1, w2, b2, *, max_tile=16384, small_n_threshold=2048):
    """x: (N, dim) f32; w1: (hidden, dim); b1: (hidden,); w2: (1, hidden); b2: (1,).
    Returns (N,) f32, matching PyTorch CommittorNet.forward(x) for 2-D x."""
    N, dim = x.shape
    hidden = w1.shape[0]

    if N == 0:
        return jnp.zeros((0,), jnp.float32)

    # Small-N fast path: pad + pallas_call + slice launches dominate below a
    # few thousand rows; a single fused XLA expression wins there.
    if N < small_n_threshold:
        return _reference_forward(x, w1, b1, w2, b2)

    tile = _choose_tile(N, max_tile)
    n_pad = pl.cdiv(N, tile) * tile

    # Transposed, zero-padded input: (dim, N_pad).  Padded columns produce
    # harmless values that are sliced away below.  lax.pad is one fused op
    # (no alloc + scatter).
    xT = jax.lax.pad(x.T, jnp.float32(0), ((0, 0, 0), (0, n_pad - N, 0)))

    b1c = b1.reshape(hidden, 1)
    w2c = w2.reshape(1, hidden).T          # (hidden, 1)
    b2c = b2.reshape(1, 1)

    outT = pl.pallas_call(
        committor_kernel,
        out_shape=jax.ShapeDtypeStruct((1, n_pad), jnp.float32),
        grid_spec=pltpu.PrefetchScalarGridSpec(
            num_scalar_prefetch=0,
            grid=(n_pad // tile,),
            in_specs=[
                pl.BlockSpec((dim, tile), lambda i: (0, i)),      # x tile (streamed)
                pl.BlockSpec((hidden, dim), lambda i: (0, 0)),    # W1 (resident)
                pl.BlockSpec((hidden, 1), lambda i: (0, 0)),      # b1 (resident)
                pl.BlockSpec((hidden, 1), lambda i: (0, 0)),      # W2 (resident)
                pl.BlockSpec((1, 1), lambda i: (0, 0)),           # b2 (resident)
            ],
            out_specs=pl.BlockSpec((1, tile), lambda i: (0, i)),
        ),
        compiler_params=pltpu.CompilerParams(
            dimension_semantics=("parallel",),   # lets v7x shard across its 2 TCs
            vmem_limit_bytes=32 * 1024 * 1024,   # cover (56, tile) f32 intermediates
        ),
    )(xT, w1, b1c, w2c, b2c)

    # .squeeze() equivalent + drop padded columns: (1, N_pad) -> (N,)
    return outT[0, :N]


def init_params(key, dim=2, hidden=50):
    """Deterministic init mimicking torch.nn.Linear default (U[-1/sqrt(fan_in), +]).
    Weights kept in PyTorch layout: W1 (hidden, dim), W2 (1, hidden)."""
    k1, k2, k3, k4 = jax.random.split(key, 4)
    bound1 = 1.0 / jnp.sqrt(jnp.float32(dim))
    bound2 = 1.0 / jnp.sqrt(jnp.float32(hidden))
    w1 = jax.random.uniform(k1, (hidden, dim), jnp.float32, -bound1, bound1)
    b1 = jax.random.uniform(k2, (hidden,), jnp.float32, -bound1, bound1)
    w2 = jax.random.uniform(k3, (1, hidden), jnp.float32, -bound2, bound2)
    b2 = jax.random.uniform(k4, (1,), jnp.float32, -bound2, bound2)
    return w1, b1, w2, b2


if __name__ == "__main__":
    key = jax.random.PRNGKey(0)
    kx, kp = jax.random.split(key)

    dim = 2
    hidden = 50
    N = 512  # small batch of 2D points (e.g. samples on the Muller-Brown surface)

    x = jax.random.uniform(kx, (N, dim), jnp.float32, -2.0, 1.5)
    w1, b1, w2, b2 = init_params(kp, dim=dim, hidden=hidden)

    # Force the Pallas path (small_n_threshold=0) so the kernel itself runs:
    # _choose_tile gives tile=256, grid=(2,) here -> exercises the multi-step path.
    out = committor_net(x, w1, b1, w2, b2, small_n_threshold=0)
    jax.block_until_ready(out)

    ref = _reference_forward(x, w1, b1, w2, b2)
    assert out.shape == (N,)
    assert jnp.allclose(out, ref, atol=1e-5, rtol=1e-5)

    # Also sanity-check the small-N fast path (skips Pallas by design).
    xs = x[:37]
    out_small = committor_net(xs, w1, b1, w2, b2)  # default threshold -> plain jnp
    jax.block_until_ready(out_small)
    assert jnp.allclose(out_small, _reference_forward(xs, w1, b1, w2, b2),
                        atol=1e-5, rtol=1e-5)

    print("KERNEL_OK")
</pallas_src>

<mosaic_0001>
module attributes {stable_mosaic.version = 11 : i64} {
  func.func @committor_kernel(%arg0: i32, %arg1: memref<2x256xf32, #tpu.memory_space<vmem>>, %arg2: memref<50x2xf32, #tpu.memory_space<vmem>>, %arg3: memref<50x1xf32, #tpu.memory_space<vmem>>, %arg4: memref<50x1xf32, #tpu.memory_space<vmem>>, %arg5: memref<1x1xf32, #tpu.memory_space<vmem>>, %arg6: memref<1x256xf32, #tpu.memory_space<vmem>>) attributes {dimension_semantics = [#tpu.dimension_semantics<parallel>], iteration_bounds = array<i64: 2>, scalar_prefetch = 0 : i64, scratch_operands = 0 : i64, tpu.core_type = #tpu.core_type<tc>, window_params = [{transform_indices = @transform_0, window_bounds = array<i64: 2, 256>}, {pipeline_mode = #tpu.pipeline_mode<synchronous>, transform_indices = @transform_1, window_bounds = array<i64: 50, 2>}, {pipeline_mode = #tpu.pipeline_mode<synchronous>, transform_indices = @transform_2, window_bounds = array<i64: 50, 1>}, {pipeline_mode = #tpu.pipeline_mode<synchronous>, transform_indices = @transform_3, window_bounds = array<i64: 50, 1>}, {pipeline_mode = #tpu.pipeline_mode<synchronous>, transform_indices = @transform_4, window_bounds = array<i64: 1, 1>}, {transform_indices = @transform_5, window_bounds = array<i64: 1, 256>}]} {
    %c0 = arith.constant 0 : index
    %c0_0 = arith.constant 0 : index
    %0 = vector.load %arg1[%c0, %c0_0] : memref<2x256xf32, #tpu.memory_space<vmem>>, vector<2x256xf32>
    %c0_1 = arith.constant 0 : index
    %c0_2 = arith.constant 0 : index
    %1 = vector.load %arg2[%c0_1, %c0_2] : memref<50x2xf32, #tpu.memory_space<vmem>>, vector<50x2xf32>
    %2 = vector.extract_strided_slice %1 {offsets = [0, 0], sizes = [50, 1], strides = [1, 1]} : vector<50x2xf32> to vector<50x1xf32>
    %3 = vector.extract_strided_slice %0 {offsets = [0, 0], sizes = [1, 256], strides = [1, 1]} : vector<2x256xf32> to vector<1x256xf32>
    %4 = vector.broadcast %2 : vector<50x1xf32> to vector<50x256xf32>
    %5 = vector.broadcast %3 : vector<1x256xf32> to vector<50x256xf32>
    %6 = arith.mulf %4, %5 : vector<50x256xf32>
    %7 = vector.extract_strided_slice %1 {offsets = [0, 1], sizes = [50, 1], strides = [1, 1]} : vector<50x2xf32> to vector<50x1xf32>
    %8 = vector.extract_strided_slice %0 {offsets = [1, 0], sizes = [1, 256], strides = [1, 1]} : vector<2x256xf32> to vector<1x256xf32>
    %9 = vector.broadcast %7 : vector<50x1xf32> to vector<50x256xf32>
    %10 = vector.broadcast %8 : vector<1x256xf32> to vector<50x256xf32>
    %11 = arith.mulf %9, %10 : vector<50x256xf32>
    %12 = arith.addf %6, %11 : vector<50x256xf32>
    %c0_3 = arith.constant 0 : index
    %c0_4 = arith.constant 0 : index
    %13 = vector.load %arg3[%c0_3, %c0_4] : memref<50x1xf32, #tpu.memory_space<vmem>>, vector<50x1xf32>
    %14 = vector.broadcast %13 : vector<50x1xf32> to vector<50x256xf32>
    %15 = arith.addf %12, %14 : vector<50x256xf32>
    %16 = math.tanh %15 : vector<50x256xf32>
    %c0_5 = arith.constant 0 : index
    %c0_6 = arith.constant 0 : index
    %17 = vector.load %arg4[%c0_5, %c0_6] : memref<50x1xf32, #tpu.memory_space<vmem>>, vector<50x1xf32>
    %18 = vector.broadcast %17 : vector<50x1xf32> to vector<50x256xf32>
    %19 = arith.mulf %16, %18 : vector<50x256xf32>
    %cst = arith.constant dense<0.000000e+00> : vector<256xf32>
    %20 = vector.multi_reduction <add>, %19, %cst [0] : vector<50x256xf32> to vector<256xf32>
    %21 = vector.shape_cast %20 : vector<256xf32> to vector<1x256xf32>
    %c0_7 = arith.constant 0 : index
    %c0_8 = arith.constant 0 : index
    %22 = vector.load %arg5[%c0_7, %c0_8] : memref<1x1xf32, #tpu.memory_space<vmem>>, vector<1x1xf32>
    %23 = vector.broadcast %22 : vector<1x1xf32> to vector<1x256xf32>
    %24 = arith.addf %21, %23 : vector<1x256xf32>
    %c0_9 = arith.constant 0 : index
    %c0_10 = arith.constant 0 : index
    %25 = vector.load %arg6[%c0_9, %c0_10] : memref<1x256xf32, #tpu.memory_space<vmem>>, vector<1x256xf32>
    tpu.vector_store %arg6[%c0_9, %c0_10], %24 {strides = array<i32>} : memref<1x256xf32, #tpu.memory_space<vmem>>, vector<1x256xf32>,
    return
  }
  func.func @transform_0(%arg0: i32) -> (i32, i32) {
    %c0_i32 = arith.constant 0 : i32
    %c0_i32_0 = arith.constant 0 : i32
    return %c0_i32, %arg0 : i32, i32
  }
  func.func @transform_1(%arg0: i32) -> (i32, i32) {
    %c0_i32 = arith.constant 0 : i32
    %c0_i32_0 = arith.constant 0 : i32
    %c0_i32_1 = arith.constant 0 : i32
    return %c0_i32, %c0_i32_0 : i32, i32
  }
  func.func @transform_2(%arg0: i32) -> (i32, i32) {
    %c0_i32 = arith.constant 0 : i32
    %c0_i32_0 = arith.constant 0 : i32
    %c0_i32_1 = arith.constant 0 : i32
    return %c0_i32, %c0_i32_0 : i32, i32
  }
  func.func @transform_3(%arg0: i32) -> (i32, i32) {
    %c0_i32 = arith.constant 0 : i32
    %c0_i32_0 = arith.constant 0 : i32
    %c0_i32_1 = arith.constant 0 : i32
    return %c0_i32, %c0_i32_0 : i32, i32
  }
  func.func @transform_4(%arg0: i32) -> (i32, i32) {
    %c0_i32 = arith.constant 0 : i32
    %c0_i32_0 = arith.constant 0 : i32
    %c0_i32_1 = arith.constant 0 : i32
    return %c0_i32, %c0_i32_0 : i32, i32
  }
  func.func @transform_5(%arg0: i32) -> (i32, i32) {
    %c0_i32 = arith.constant 0 : i32
    %c0_i32_0 = arith.constant 0 : i32
    return %c0_i32, %arg0 : i32, i32
  }
}

</mosaic_0001>

<llo_original>
// kernel: tpu_custom_call.1
$region0: #{tpu_custom_call.1}
  #allocation0 [shape = 'u32[]', space=smem, size = 0x4, offset = 0x4, fixed_abs, tag = 'smem constant byte address 0x4 - core index']
  #allocation1 [shape = 'u32[144,128]{1,0:T(1,128)}', space=vmem, size = 0x12000, scoped, tag = 'internal scratch']
  #allocation2 [shape = 'f32[1,1]{1,0:T(1,128)S(1)}', space=vmem, size = 0x200, scoped, tag = 'scoped memory for tpu_custom_call.1']
  %s0 = inlined_call_operand.vmem [shape: f32[2,512], index: 0, kind: input, shape index: {}]
  %s1 = inlined_call_operand.vmem [shape: f32[50,2], index: 1, kind: input, shape index: {}]
  %s2 = inlined_call_operand.vmem [shape: f32[50,1], index: 2, kind: input, shape index: {}]
  %s3 = inlined_call_operand.vmem [shape: f32[50,1], index: 3, kind: input, shape index: {}]
  %s4 = inlined_call_operand.<no memory space> [shape: f32[1,1], index: 4, kind: input, shape index: {}]
  %s5 = inlined_call_operand.hbm [shape: f32[1,512], index: 5, kind: output, shape index: {}]
  %s6 = sld [smem:[#allocation0]]
  $region53: #{tpu_custom_call.1} parent=0
    _
  %s8 = ssub.s32 1, %s6
  %s9 = scalar_select 0, %s8, %s6
  %v10 = vstv %s4
  %11 = vst [vmem:[#allocation2] sm:$0x1] %v10
  $region1: #{tpu_custom_call.1} parent=0
    #allocation3 [shape = 'u8[2048]{0}', space=vmem, size = 0x800, scoped, tag = 'output window, operand 0']
    #allocation4 [shape = 's32[2]{0}', space=sflag, size = 0x8, scoped, tag = 'scoped memory for tpu_custom_call.1']
    %12 = vsyncpa [#allocation4], 0
    %s13 = scalar_lea.sflag [#allocation4], 1
    %14 = vsyncpa %s13, 0
    loop: start=0, step=1, limit=4
    $region2: #{tpu_custom_call.1} parent=1 // loop_pre_header
      _
    $region3: #{tpu_custom_call.1} parent=1 // loop_header
      %s16 = sphi 0, %s20
      %p17 = scmp.ge.s32.totalorder %s16, 4
      %s26 = sphi 0, %s28
      %s29 = sphi 0, %s26
      %s30 = sphi 0, %s29
      %s46 = sphi 0, %s30
      %s50 = sphi 0, %s50
      %s52 = sphi 0, %s50
      %s53 = sphi 0, %s52
      %s67 = sphi 0, %s53
      %s71 = sphi 0, %s71
      %s73 = sphi 0, %s71
      %s74 = sphi 0, %s73
      %s88 = sphi 0, %s74
      %s92 = sphi 0, %s92
      %s94 = sphi 0, %s92
      %s95 = sphi 0, %s94
      %s109 = sphi 0, %s95
      %s113 = sphi 0, %s113
      %s115 = sphi 0, %s113
      %s116 = sphi 0, %s115
      %s130 = sphi 0, %s116
      %s136 = sphi 0, %s138
      %s139 = sphi 0, %s136
      %s140 = sphi 0, %s139
      %s156 = sphi 0, %s140
    $region4: #{tpu_custom_call.1} parent=1 // loop_header_branch
      %19 = sbr.rel (%p17) target = $region8
    $region5: #{tpu_custom_call.1} parent=1 // loop_body
      %s21 = ssub.s32 %s16, 1
      %s22 = ssub.s32 %s16, 2
      %s23 = sadd.s32 %s16, 1
      %s24 = ssub.s32 %s16, %s23
      %p25 = scmp.eq.s32.totalorder %s24, 0
      %s27 = sadd.s32 %s26, 1
      %s28 = scalar_select %p25, %s26, %s27
      %p31 = pneg %p25
      %p32 = scmp.eq.s32.totalorder %s16, 1
      %p33 = por %p31, %p32
      %p34 = scmp.ne.s32.totalorder %s26, %s29
      %p35 = scmp.eq.s32.totalorder %s16, 0
      %p36 = por %p34, %p35
      %p37 = scmp.ne.s32.totalorder %s26, %s29
      %p38 = scmp.eq.s32.totalorder %s21, 1
      %p39 = por %p37, %p38
      %p40 = scmp.ne.s32.totalorder %s29, %s30
      %p41 = scmp.eq.s32.totalorder %s21, 0
      %p42 = por %p40, %p41
      %p43 = scmp.ne.s32.totalorder %s29, %s30
      %p44 = scmp.eq.s32.totalorder %s22, 1
      %p45 = por %p43, %p44
      %p47 = scmp.ne.s32.totalorder %s30, %s46
      %p48 = scmp.eq.s32.totalorder %s22, 0
      %p49 = por %p47, %p48
      %s51 = sadd.s32 %s50, 1
      %p54 = scmp.eq.s32.totalorder %s16, 1
      %p55 = scmp.ne.s32.totalorder %s50, %s52
      %p56 = scmp.eq.s32.totalorder %s16, 0
      %p57 = por %p55, %p56
      %p58 = scmp.ne.s32.totalorder %s50, %s52
      %p59 = scmp.eq.s32.totalorder %s21, 1
      %p60 = por %p58, %p59
      %p61 = scmp.ne.s32.totalorder %s52, %s53
      %p62 = scmp.eq.s32.totalorder %s21, 0
      %p63 = por %p61, %p62
      %p64 = scmp.ne.s32.totalorder %s52, %s53
      %p65 = scmp.eq.s32.totalorder %s22, 1
      %p66 = por %p64, %p65
      %p68 = scmp.ne.s32.totalorder %s53, %s67
      %p69 = scmp.eq.s32.totalorder %s22, 0
      %p70 = por %p68, %p69
      %s72 = sadd.s32 %s71, 1
      %p75 = scmp.eq.s32.totalorder %s16, 1
      %p76 = scmp.ne.s32.totalorder %s71, %s73
      %p77 = scmp.eq.s32.totalorder %s16, 0
      %p78 = por %p76, %p77
      %p79 = scmp.ne.s32.totalorder %s71, %s73
      %p80 = scmp.eq.s32.totalorder %s21, 1
      %p81 = por %p79, %p80
      %p82 = scmp.ne.s32.totalorder %s73, %s74
      %p83 = scmp.eq.s32.totalorder %s21, 0
      %p84 = por %p82, %p83
      %p85 = scmp.ne.s32.totalorder %s73, %s74
      %p86 = scmp.eq.s32.totalorder %s22, 1
      %p87 = por %p85, %p86
      %p89 = scmp.ne.s32.totalorder %s74, %s88
      %p90 = scmp.eq.s32.totalorder %s22, 0
      %p91 = por %p89, %p90
      %s93 = sadd.s32 %s92, 1
      %p96 = scmp.eq.s32.totalorder %s16, 1
      %p97 = scmp.ne.s32.totalorder %s92, %s94
      %p98 = scmp.eq.s32.totalorder %s16, 0
      %p99 = por %p97, %p98
      %p100 = scmp.ne.s32.totalorder %s92, %s94
      %p101 = scmp.eq.s32.totalorder %s21, 1
      %p102 = por %p100, %p101
      %p103 = scmp.ne.s32.totalorder %s94, %s95
      %p104 = scmp.eq.s32.totalorder %s21, 0
      %p105 = por %p103, %p104
      %p106 = scmp.ne.s32.totalorder %s94, %s95
      %p107 = scmp.eq.s32.totalorder %s22, 1
      %p108 = por %p106, %p107
      %p110 = scmp.ne.s32.totalorder %s95, %s109
      %p111 = scmp.eq.s32.totalorder %s22, 0
      %p112 = por %p110, %p111
      %s114 = sadd.s32 %s113, 1
      %p117 = scmp.eq.s32.totalorder %s16, 1
      %p118 = scmp.ne.s32.totalorder %s113, %s115
      %p119 = scmp.eq.s32.totalorder %s16, 0
      %p120 = por %p118, %p119
      %p121 = scmp.ne.s32.totalorder %s113, %s115
      %p122 = scmp.eq.s32.totalorder %s21, 1
      %p123 = por %p121, %p122
      %p124 = scmp.ne.s32.totalorder %s115, %s116
      %p125 = scmp.eq.s32.totalorder %s21, 0
      %p126 = por %p124, %p125
      %p127 = scmp.ne.s32.totalorder %s115, %s116
      %p128 = scmp.eq.s32.totalorder %s22, 1
      %p129 = por %p127, %p128
      %p131 = scmp.ne.s32.totalorder %s116, %s130
      %p132 = scmp.eq.s32.totalorder %s22, 0
      %p133 = por %p131, %p132
      %s134 = ssub.s32 %s16, %s23
      %p135 = scmp.eq.s32.totalorder %s134, 0
      %s137 = sadd.s32 %s136, 1
      %s138 = scalar_select %p135, %s136, %s137
      %p141 = pneg %p135
      %p142 = scmp.eq.s32.totalorder %s16, 1
      %p143 = por %p141, %p142
      %p144 = scmp.ne.s32.totalorder %s136, %s139
      %p145 = scmp.eq.s32.totalorder %s16, 0
      %p146 = por %p144, %p145
      %p147 = scmp.ne.s32.totalorder %s136, %s139
      %p148 = scmp.eq.s32.totalorder %s21, 1
      %p149 = por %p147, %p148
      %p150 = scmp.ne.s32.totalorder %s139, %s140
      %p151 = scmp.eq.s32.totalorder %s21, 0
      %p152 = por %p150, %p151
      %p153 = scmp.ne.s32.totalorder %s139, %s140
      %p154 = scmp.eq.s32.totalorder %s22, 1
      %p155 = por %p153, %p154
      %p157 = scmp.ne.s32.totalorder %s140, %s156
      %p158 = scmp.eq.s32.totalorder %s22, 0
      %p159 = por %p157, %p158
      %p160 = scmp.le.s32.totalorder 1, %s16
      %p161 = scmp.lt.s32.totalorder %s16, 3
      %p162 = pnand %p160, %p161
      %p163 = pneg %p162
      // Predicated region
      $region9: #{tpu_custom_call.1} parent=5 // pred_check
        _
      $region10: #{tpu_custom_call.1} parent=5 // pred_check_branch
        %165 = sbr.rel (%p162) target = $region12
      $region11: #{tpu_custom_call.1} parent=5 // pred_region
        %s166 = ssub.s32 %s16, 1
        // Predicated region
        $region13: #{tpu_custom_call.1} parent=11 // pred_check
          %p167 = pneg %p63
        $region14: #{tpu_custom_call.1} parent=11 // pred_check_branch
          %169 = sbr.rel (%p167) target = $region16
        $region15: #{tpu_custom_call.1} parent=11 // pred_region
          _
        $region16: #{tpu_custom_call.1} parent=11 // pred_fallthru
          _
        // Predicated region
        $region17: #{tpu_custom_call.1} parent=11 // pred_check
          %p170 = pneg %p84
        $region18: #{tpu_custom_call.1} parent=11 // pred_check_branch
          %172 = sbr.rel (%p170) target = $region20
        $region19: #{tpu_custom_call.1} parent=11 // pred_region
          _
        $region20: #{tpu_custom_call.1} parent=11 // pred_fallthru
          _
        // Predicated region
        $region21: #{tpu_custom_call.1} parent=11 // pred_check
          %p173 = pneg %p105
        $region22: #{tpu_custom_call.1} parent=11 // pred_check_branch
          %175 = sbr.rel (%p173) target = $region24
        $region23: #{tpu_custom_call.1} parent=11 // pred_region
          _
        $region24: #{tpu_custom_call.1} parent=11 // pred_fallthru
          _
        // Predicated region
        $region25: #{tpu_custom_call.1} parent=11 // pred_check
          %p176 = pneg %p126
        $region26: #{tpu_custom_call.1} parent=11 // pred_check_branch
          %178 = sbr.rel (%p176) target = $region28
        $region27: #{tpu_custom_call.1} parent=11 // pred_region
          _
        $region28: #{tpu_custom_call.1} parent=11 // pred_fallthru
          _
      $region12: #{tpu_custom_call.1} parent=5 // pred_fallthru
        _
      %p179 = scmp.lt.s32.totalorder %s16, 2
      // Predicated region
      $region29: #{tpu_custom_call.1} parent=5 // pred_check
        %p180 = pneg %p179
      $region30: #{tpu_custom_call.1} parent=5 // pred_check_branch
        %182 = sbr.rel (%p180) target = $region32
      $region31: #{tpu_custom_call.1} parent=5 // pred_region
        // Predicated region
        $region33: #{tpu_custom_call.1} parent=31 // pred_check
          %p183 = pneg %p36
        $region34: #{tpu_custom_call.1} parent=31 // pred_check_branch
          %185 = sbr.rel (%p183) target = $region36
        $region35: #{tpu_custom_call.1} parent=31 // pred_region
          %s186 = smul.u32 2, %s16
          %p187 = scmp.lt.s32.totalorder %s186, 3
          %s188 = scalar_select %p187, %s186, 3
          %s189 = smul.addr %s188, 2
          %s190 = scalar_lea.vmem %s0, %s189
          %s191 = smul.u32 2, %s16
        $region36: #{tpu_custom_call.1} parent=31 // pred_fallthru
          _
      $region32: #{tpu_custom_call.1} parent=5 // pred_fallthru
        _
      %p192 = scmp.le.s32.totalorder 1, %s16
      %p193 = scmp.lt.s32.totalorder %s16, 3
      %p194 = pnand %p192, %p193
      %p195 = pneg %p194
      // Predicated region
      $region37: #{tpu_custom_call.1} parent=5 // pred_check
        _
      $region38: #{tpu_custom_call.1} parent=5 // pred_check_branch
        %197 = sbr.rel (%p194) target = $region40
      $region39: #{tpu_custom_call.1} parent=5 // pred_region
        %s198 = ssub.s32 %s16, 1
        %s199 = smul.u32 2, %s21
        %p200 = scmp.lt.s32.totalorder %s199, 3
        %s201 = scalar_select %p200, %s199, 3
        %s202 = smul.addr %s201, 2
        %s203 = scalar_lea.vmem %s0, %s202
        %p204 = pneg %p42
        %p205 = pneg %p39
        %p206 = pneg %p63
        %p207 = pneg %p60
        %p208 = pneg %p84
        %p209 = pneg %p81
        %p210 = pneg %p105
        %p211 = pneg %p102
        %p212 = pneg %p126
        %p213 = pneg %p123
        %p214 = pneg %p152
        %p215 = pneg %p149
        %s216 = sand.u32 %s139, 1
        %s217 = scalar_lea.sflag [#allocation4], %s216
        %s218 = sand.u32 %s139, 1
        %s219 = smul.addr %s218, 2
        %s220 = scalar_lea.vmem [#allocation3], %s219
        %s221 = smul.u32 2, %s21
        %p222 = scmp.lt.s32.totalorder %s221, 3
        %s223 = scalar_select %p222, %s221, 3
        %s224 = smul.addr %s223, 2
        %s225 = scalar_lea.vmem %s0, %s224
        %s226 = smul.u32 2, %s21
        %s227 = smul.u32 2, %s21
        %v228 = vld [vmem:[%s225] sm:$0xf]
        %v229 = vld [vmem:[%s1] sm:$0xff]
        %v230 = vld [vmem:[%s1 + $0x8] sm:$0xff]
        %v231 = vld [vmem:[%s1 + $0x10] sm:$0xff]
        %v232 = vld [vmem:[%s1 + $0x18] sm:$0xff]
        %v233 = vld [vmem:[%s1 + $0x20] sm:$0xff]
        %v234 = vld [vmem:[%s1 + $0x28] sm:$0xff]
        %v235 = vld [vmem:[%s1 + $0x30] sm:$0x3]
        %237 = vset.pattern.permute.xlu0 0
        %238 = vperm.xlu0 %237, %v229
        %v239 = vpop.permute.xlu0 %238
        %242 = vset.pattern.permute.xlu0 0
        %243 = vperm.xlu0 %242, %v230
        %v244 = vpop.permute.xlu0 %243
        %247 = vset.pattern.permute.xlu0 0
        %248 = vperm.xlu0 %247, %v231
        %v249 = vpop.permute.xlu0 %248
        %252 = vset.pattern.permute.xlu0 0
        %253 = vperm.xlu0 %252, %v232
        %v254 = vpop.permute.xlu0 %253
        %257 = vset.pattern.permute.xlu0 0
        %258 = vperm.xlu0 %257, %v233
        %v259 = vpop.permute.xlu0 %258
        %262 = vset.pattern.permute.xlu0 0
        %263 = vperm.xlu0 %262, %v234
        %v264 = vpop.permute.xlu0 %263
        %267 = vset.pattern.permute.xlu0 0
        %268 = vperm.xlu0 %267, %v235
        %v269 = vpop.permute.xlu0 %268
        %v272 = vlaneseq
        %v273 = vshrl.u32 %v272, 7
        %v274 = vsub.s32 0, %v273
        %v275 = vrot.slane %v228, %v274
        %v276 = vlaneseq
        %v277 = vshrl.u32 %v276, 7
        %v278 = vsub.s32 2, %v277
        %v279 = vrot.slane %v228, %v278
        %v282 = vlaneseq
        %v283 = vshrl.u32 %v282, 7
        %v284 = vsub.s32 0, %v283
        %v285 = vrot.slane %v275, %v284
        %v286 = vlaneseq
        %v287 = vshrl.u32 %v286, 7
        %v288 = vsub.s32 0, %v287
        %v289 = vrot.slane %v279, %v288
        %v290 = vmul.f32 %v239, %v285
        %v291 = vmul.f32 %v239, %v289
        %v292 = vmul.f32 %v244, %v285
        %v293 = vmul.f32 %v244, %v289
        %v294 = vmul.f32 %v249, %v285
        %v295 = vmul.f32 %v249, %v289
        %v296 = vmul.f32 %v254, %v285
        %v297 = vmul.f32 %v254, %v289
        %v298 = vmul.f32 %v259, %v285
        %v299 = vmul.f32 %v259, %v289
        %v300 = vmul.f32 %v264, %v285
        %v301 = vmul.f32 %v264, %v289
        %v302 = vmul.f32 %v269, %v285
        %v303 = vmul.f32 %v269, %v289
        %304 = vset.pattern.permute.xlu0 1
        %305 = vperm.xlu0 %304, %v229
        %v306 = vpop.permute.xlu0 %305
        %308 = vset.pattern.permute.xlu0 1
        %309 = vperm.xlu0 %308, %v230
        %v310 = vpop.permute.xlu0 %309
        %312 = vset.pattern.permute.xlu0 1
        %313 = vperm.xlu0 %312, %v231
        %v314 = vpop.permute.xlu0 %313
        %316 = vset.pattern.permute.xlu0 1
        %317 = vperm.xlu0 %316, %v232
        %v318 = vpop.permute.xlu0 %317
        %320 = vset.pattern.permute.xlu0 1
        %321 = vperm.xlu0 %320, %v233
        %v322 = vpop.permute.xlu0 %321
        %324 = vset.pattern.permute.xlu0 1
        %325 = vperm.xlu0 %324, %v234
        %v326 = vpop.permute.xlu0 %325
        %328 = vset.pattern.permute.xlu0 1
        %329 = vperm.xlu0 %328, %v235
        %v330 = vpop.permute.xlu0 %329
        %v332 = vlaneseq
        %v333 = vshrl.u32 %v332, 7
        %v334 = vsub.s32 1, %v333
        %v335 = vrot.slane %v228, %v334
        %v336 = vlaneseq
        %v337 = vshrl.u32 %v336, 7
        %v338 = vsub.s32 3, %v337
        %v339 = vrot.slane %v228, %v338
        %v342 = vlaneseq
        %v343 = vshrl.u32 %v342, 7
        %v344 = vsub.s32 1, %v343
        %v345 = vrot.slane %v335, %v344
        %v346 = vlaneseq
        %v347 = vshrl.u32 %v346, 7
        %v348 = vsub.s32 1, %v347
        %v349 = vrot.slane %v339, %v348
        %v350 = vmul.f32 %v306, %v345
        %v351 = vmul.f32 %v306, %v349
        %v352 = vmul.f32 %v310, %v345
        %v353 = vmul.f32 %v310, %v349
        %v354 = vmul.f32 %v314, %v345
        %v355 = vmul.f32 %v314, %v349
        %v356 = vmul.f32 %v318, %v345
        %v357 = vmul.f32 %v318, %v349
        %v358 = vmul.f32 %v322, %v345
        %v359 = vmul.f32 %v322, %v349
        %v360 = vmul.f32 %v326, %v345
        %v361 = vmul.f32 %v326, %v349
        %v362 = vmul.f32 %v330, %v345
        %v363 = vmul.f32 %v330, %v349
        %v364 = vadd.f32 %v290, %v350
        %v365 = vadd.f32 %v291, %v351
        %v366 = vadd.f32 %v292, %v352
        %v367 = vadd.f32 %v293, %v353
        %v368 = vadd.f32 %v294, %v354
        %v369 = vadd.f32 %v295, %v355
        %v370 = vadd.f32 %v296, %v356
        %v371 = vadd.f32 %v297, %v357
        %v372 = vadd.f32 %v298, %v358
        %v373 = vadd.f32 %v299, %v359
        %v374 = vadd.f32 %v300, %v360
        %v375 = vadd.f32 %v301, %v361
        %v376 = vadd.f32 %v302, %v362
        %v377 = vadd.f32 %v303, %v363
        %v378 = vld [vmem:[%s2] sm:$0xff]
        %v379 = vld [vmem:[%s2 + $0x8] sm:$0xff]
        %v380 = vld [vmem:[%s2 + $0x10] sm:$0xff]
        %v381 = vld [vmem:[%s2 + $0x18] sm:$0xff]
        %v382 = vld [vmem:[%s2 + $0x20] sm:$0xff]
        %v383 = vld [vmem:[%s2 + $0x28] sm:$0xff]
        %v384 = vld [vmem:[%s2 + $0x30] sm:$0x3]
        %386 = vset.pattern.permute.xlu0 0
        %387 = vperm.xlu0 %386, %v378
        %v388 = vpop.permute.xlu0 %387
        %391 = vset.pattern.permute.xlu0 0
        %392 = vperm.xlu0 %391, %v379
        %v393 = vpop.permute.xlu0 %392
        %396 = vset.pattern.permute.xlu0 0
        %397 = vperm.xlu0 %396, %v380
        %v398 = vpop.permute.xlu0 %397
        %401 = vset.pattern.permute.xlu0 0
        %402 = vperm.xlu0 %401, %v381
        %v403 = vpop.permute.xlu0 %402
        %406 = vset.pattern.permute.xlu0 0
        %407 = vperm.xlu0 %406, %v382
        %v408 = vpop.permute.xlu0 %407
        %411 = vset.pattern.permute.xlu0 0
        %412 = vperm.xlu0 %411, %v383
        %v413 = vpop.permute.xlu0 %412
        %416 = vset.pattern.permute.xlu0 0
        %417 = vperm.xlu0 %416, %v384
        %v418 = vpop.permute.xlu0 %417
        %v420 = vadd.f32 %v364, %v388
        %v421 = vadd.f32 %v365, %v388
        %v422 = vadd.f32 %v366, %v393
        %v423 = vadd.f32 %v367, %v393
        %v424 = vadd.f32 %v368, %v398
        %v425 = vadd.f32 %v369, %v398
        %v426 = vadd.f32 %v370, %v403
        %v427 = vadd.f32 %v371, %v403
        %v428 = vadd.f32 %v372, %v408
        %v429 = vadd.f32 %v373, %v408
        %v430 = vadd.f32 %v374, %v413
        %v431 = vadd.f32 %v375, %v413
        %v432 = vadd.f32 %v376, %v418
        %v433 = vadd.f32 %v377, %v418
        %v434 = vtanh.pop %v420
        %v435 = vtanh.pop %v421
        %v436 = vtanh.pop %v422
        %v437 = vtanh.pop %v423
        %v438 = vtanh.pop %v424
        %v439 = vtanh.pop %v425
        %v440 = vtanh.pop %v426
        %v441 = vtanh.pop %v427
        %v442 = vtanh.pop %v428
        %v443 = vtanh.pop %v429
        %v444 = vtanh.pop %v430
        %v445 = vtanh.pop %v431
        %v446 = vtanh.pop %v432
        %v447 = vtanh.pop %v433
        %v448 = vld [vmem:[%s3] sm:$0xff]
        %v449 = vld [vmem:[%s3 + $0x8] sm:$0xff]
        %v450 = vld [vmem:[%s3 + $0x10] sm:$0xff]
        %v451 = vld [vmem:[%s3 + $0x18] sm:$0xff]
        %v452 = vld [vmem:[%s3 + $0x20] sm:$0xff]
        %v453 = vld [vmem:[%s3 + $0x28] sm:$0xff]
        %v454 = vld [vmem:[%s3 + $0x30] sm:$0x3]
        %456 = vset.pattern.permute.xlu0 0
        %457 = vperm.xlu0 %456, %v448
        %v458 = vpop.permute.xlu0 %457
        %461 = vset.pattern.permute.xlu0 0
        %462 = vperm.xlu0 %461, %v449
        %v463 = vpop.permute.xlu0 %462
        %466 = vset.pattern.permute.xlu0 0
        %467 = vperm.xlu0 %466, %v450
        %v468 = vpop.permute.xlu0 %467
        %471 = vset.pattern.permute.xlu0 0
        %472 = vperm.xlu0 %471, %v451
        %v473 = vpop.permute.xlu0 %472
        %476 = vset.pattern.permute.xlu0 0
        %477 = vperm.xlu0 %476, %v452
        %v478 = vpop.permute.xlu0 %477
        %481 = vset.pattern.permute.xlu0 0
        %482 = vperm.xlu0 %481, %v453
        %v483 = vpop.permute.xlu0 %482
        %486 = vset.pattern.permute.xlu0 0
        %487 = vperm.xlu0 %486, %v454
        %v488 = vpop.permute.xlu0 %487
        %v490 = vmul.f32 %v434, %v458
        %v491 = vmul.f32 %v435, %v458
        %v492 = vmul.f32 %v436, %v463
        %v493 = vmul.f32 %v437, %v463
        %v494 = vmul.f32 %v438, %v468
        %v495 = vmul.f32 %v439, %v468
        %v496 = vmul.f32 %v440, %v473
        %v497 = vmul.f32 %v441, %v473
        %v498 = vmul.f32 %v442, %v478
        %v499 = vmul.f32 %v443, %v478
        %v500 = vmul.f32 %v444, %v483
        %v501 = vmul.f32 %v445, %v483
        %v502 = vmul.f32 %v446, %v488
        %v503 = vmul.f32 %v447, %v488
        %v504 = vadd.f32 %v490, %v492
        %v505 = vadd.f32 %v504, %v494
        %v506 = vadd.f32 %v505, %v496
        %v507 = vadd.f32 %v506, %v498
        %v508 = vadd.f32 %v507, %v500
        %vm509 = vcmask 1041408
        %v510 = vsel %vm509, %v502, 0.0
        %v511 = vadd.f32 %v508, %v510
        %v512 = vrot.slane %v511, 4
        %v513 = vadd.f32 %v511, %v512
        %v514 = vrot.slane %v513, 2
        %v515 = vadd.f32 %v513, %v514
        %v516 = vrot.slane %v515, 1
        %v517 = vadd.f32 %v515, %v516
        %v518 = vadd.f32 %v491, %v493
        %v519 = vadd.f32 %v518, %v495
        %v520 = vadd.f32 %v519, %v497
        %v521 = vadd.f32 %v520, %v499
        %v522 = vadd.f32 %v521, %v501
        %v523 = vsel %vm509, %v503, 0.0
        %v524 = vadd.f32 %v522, %v523
        %v525 = vrot.slane %v524, 4
        %v526 = vadd.f32 %v524, %v525
        %v527 = vrot.slane %v526, 2
        %v528 = vadd.f32 %v526, %v527
        %v529 = vrot.slane %v528, 1
        %v530 = vadd.f32 %v528, %v529
        %v531 = vld [vmem:[#allocation2] sm:$0x1]
        %533 = vset.pattern.permute.xlu0 0
        %534 = vperm.xlu0 %533, %v531
        %v535 = vpop.permute.xlu0 %534
        %v537 = vlaneseq
        %v538 = vshrl.u32 %v537, 7
        %v539 = vsub.s32 0, %v538
        %v540 = vrot.slane %v535, %v539
        %v541 = vadd.f32 %v517, %v540
        %v542 = vadd.f32 %v530, %v540
        %v545 = vcombine.low %v541, %v542
        %v547 = vunpack.c.l.s4 1966171168
        %v548 = vunpack.c.0.s8 %v547
        %v549 = vlaneseq
        %v550 = vshrl.u32 %v549, 7
        %v551 = vsub.s32 %v548, %v550
        %v552 = vrot.slane %v545, %v551
        %v554 = vunpack.c.l.s4 1966171168
        %v555 = vunpack.c.0.s8 %v554
        %v556 = vlaneseq
        %v557 = vshrl.u32 %v556, 7
        %v558 = vsub.s32 %v555, %v557
        %v559 = vrot.slane %v552, %v558
        %v561 = vlaneseq
        %vm562 = vcmp.ge.s32.totalorder %v561, 0
        %vm563 = vcmp.lt.s32.totalorder %v561, 256
        %vm564 = vmand %vm562, %vm563
        %565 = vst.msk [vmem:[%s220] sm:$0x3] %vm564, %v559
        %s566 = sand.u32 %s139, 1
        %s567 = scalar_lea.sflag [#allocation4], %s566
        %s568 = sand.u32 %s139, 1
        %s569 = smul.addr %s568, 2
        %s570 = scalar_lea.vmem [#allocation3], %s569
        // Predicated region
        $region41: #{tpu_custom_call.1} parent=39 // pred_check
          %p571 = pneg %p149
        $region42: #{tpu_custom_call.1} parent=39 // pred_check_branch
          %573 = sbr.rel (%p571) target = $region44
        $region43: #{tpu_custom_call.1} parent=39 // pred_region
          %s574 = smul.u32 2, %s21
          %s576 = ssub.s32 32, 32
          %577 = vsyncadd %s567, %s576
          %s578 = smul.addr %s574, 16
          %s579 = scalar_lea.hbm %s5, %s578
          %s581 = sshll.u32 %s570, 4
          %s582 = int_to_ptr.vmem [resolvable:$true] %s581
          %584 = dma.vmem_to_hbm [thread:$0]  %s582, 32, %s579, %s567
        $region44: #{tpu_custom_call.1} parent=39 // pred_fallthru
          _
      $region40: #{tpu_custom_call.1} parent=5 // pred_fallthru
        _
      %p585 = scmp.le.s32.totalorder 2, %s16
      // Predicated region
      $region45: #{tpu_custom_call.1} parent=5 // pred_check
        %p586 = pneg %p585
      $region46: #{tpu_custom_call.1} parent=5 // pred_check_branch
        %588 = sbr.rel (%p586) target = $region48
      $region47: #{tpu_custom_call.1} parent=5 // pred_region
        %s589 = ssub.s32 %s16, 2
        // Predicated region
        $region49: #{tpu_custom_call.1} parent=47 // pred_check
          %p590 = pneg %p155
        $region50: #{tpu_custom_call.1} parent=47 // pred_check_branch
          %592 = sbr.rel (%p590) target = $region52
        $region51: #{tpu_custom_call.1} parent=47 // pred_region
          %s593 = sand.u32 %s140, 1
          %s594 = scalar_lea.sflag [#allocation4], %s593
          %s595 = sand.u32 %s140, 1
          %s596 = smul.addr %s595, 2
          %s597 = scalar_lea.vmem [#allocation3], %s596
          %598 = dma.done %s594, 32
        $region52: #{tpu_custom_call.1} parent=47 // pred_fallthru
          _
      $region48: #{tpu_custom_call.1} parent=5 // pred_fallthru
        _
    $region6: #{tpu_custom_call.1} parent=1 // loop_footer
      %s20 = sadd.s32 1, %s16
    $region7: #{tpu_custom_call.1} parent=1 // loop_footer_branch
      %15 = sbr.rel target = $region3
    $region8: #{tpu_custom_call.1} parent=1 // loop_exit
      _
    %599 = vsyncpa [#allocation4], 1
    %s600 = scalar_lea.sflag [#allocation4], 1
    %601 = vsyncpa %s600, 1

</llo_original>
